<compile_context>
chip_gen: v7x
topology: tpu7x:2x2x1
jax: 0.10.0
libtpu: 0.0.40
codegen_flags: <defaults>
</compile_context>

<pallas_src>
import functools

import jax
import jax.numpy as jnp
from jax import lax
from jax.experimental import pallas as pl
from jax.experimental.pallas import tpu as pltpu


def _round_up(x, m):
    return (x + m - 1) // m * m


def _t5_ff_kernel(x_ref, lnw_ref, wi_ref, wo_ref, o_ref, h_ref, acc_ref, *,
                  eps, d_model):
    """One (row-tile, d_ff-tile) grid step of x + relu(RMSNorm(x)@Wi)@Wo.

    Grid: (row tiles ["parallel"], d_ff tiles ["arbitrary", innermost]).
      x_ref  : [tm, Dp]  residual input row tile (invariant over f)
      lnw_ref: [1, Dp]   T5LayerNorm scale (zero in padded lanes)
      wi_ref : [Dp, tf]  d_ff slice of Wi
      wo_ref : [tf, Dp]  d_ff slice of Wo
      h_ref  : [tm, Dp]  cached RMS-normed tile (weight dtype)
      acc_ref: [tm, Dp]  f32 accumulator for the second matmul
    """
    f = pl.program_id(1)

    @pl.when(f == 0)
    def _():
        # T5LayerNorm == RMS norm (no mean subtraction, no bias). Padded lanes
        # of x are zero, so sum(x^2)/d_model is the true mean square over D.
        xf = x_ref[...].astype(jnp.float32)
        ssq = jnp.sum(xf * xf, axis=-1, keepdims=True)
        inv_rms = lax.rsqrt(ssq * (1.0 / d_model) + eps)
        h_ref[...] = (lnw_ref[...].astype(jnp.float32)
                      * (xf * inv_rms)).astype(h_ref.dtype)
        acc_ref[...] = jnp.zeros_like(acc_ref)

    # Wi slice -> ReLU (in f32, matching the HF op order) -> Wo slice, f32 acc.
    ff = jnp.dot(h_ref[...], wi_ref[...], preferred_element_type=jnp.float32)
    ff = jnp.maximum(ff, 0.0).astype(wo_ref.dtype)
    acc_ref[...] += jnp.dot(ff, wo_ref[...], preferred_element_type=jnp.float32)

    @pl.when(f == pl.num_programs(1) - 1)
    def _():
        # Dropout is identity at inference; residual add, then downcast once.
        o_ref[...] = (x_ref[...].astype(jnp.float32)
                      + acc_ref[...]).astype(o_ref.dtype)


def _vmem_budget_bytes():
    # ~3/4 of physical VMEM: ~96 MiB on v5e/v6e (128 MiB), ~48 MiB on v7x (64).
    try:
        cap = getattr(pltpu.get_tpu_info(), "vmem_capacity_bytes", None)
        if cap:
            return int(cap) * 3 // 4
    except Exception:
        pass
    return 64 << 20


def _select_tiles(rows, Dp, Fp, x_bytes, w_bytes, sub, budget):
    """Pick (tm, tf): row tile and d_ff tile, VMEM-budget aware."""
    rows_al = _round_up(max(rows, 1), sub)

    def fits(tm, tf):
        wgt = 2 * Dp * tf * w_bytes * 2          # Wi + Wo tiles, double-buffered
        io = 2 * 2 * tm * Dp * x_bytes           # x + out tiles, double-buffered
        scr = tm * Dp * (w_bytes + 4)            # h scratch + f32 accumulator
        tmp = tm * tf * (4 + w_bytes)            # f32 ff intermediate + cast copy
        return wgt + io + scr + tmp + 2 * Dp * 4 <= budget

    tm_cands = []
    for t in (1024, 768, 512, 384, 256, 128, 64, 32, 16, 8):
        t = min(_round_up(t, sub), rows_al)
        if t not in tm_cands:
            tm_cands.append(t)           # descending, always ends at `sub`

    # 1) Weight-resident path (tf == Fp; weights DMA'd once for the whole grid)
    #    whenever it fits with a non-degenerate row tile.
    tm_res = next((t for t in tm_cands if fits(t, Fp)), None)
    if tm_res is not None and tm_res >= min(128, rows_al):
        tm, tf = tm_res, Fp
    else:
        # 2) d_ff-tiled path: prioritise a large row tile (keeps the kernel
        #    MXU-bound despite re-streaming weights once per row tile).
        tm, tf = sub, 128
        found = False
        for t in tm_cands:
            for c in (4096, 2048, 1024, 512, 256, 128):
                if c <= Fp and fits(t, c):
                    tm, tf = t, c
                    found = True
                    break
            if found:
                break

    # 3) Limit row-padding waste. With resident weights shrinking tm is free
    #    (cap waste at 1/8 extra rows); with f-tiling a smaller tm re-streams
    #    the weights more often, so only avoid gross (>1/2) padding waste.
    limit = 8 if tf >= Fp else 2
    good = [t for t in tm_cands
            if t <= tm and (_round_up(rows, t) - rows) * limit <= max(rows, 1)]
    if good:
        tm = max(good)

    # 4) v7x megacore: with resident weights make sure the parallel row axis
    #    has >= 2 steps so the second TensorCore is not idle (cheap on 1-TC
    #    chips: one extra ~0.35 us grid step).
    if tf >= Fp and rows_al >= 2 * sub and _round_up(rows, tm) // tm < 2:
        tm = max(sub, _round_up((rows + 1) // 2, sub))

    return tm, tf


def t5_layer_ff(hidden_states, ln_weight, wi, wo, *, eps=1e-6):
    """T5LayerFF forward: x + Dropout(relu(T5LayerNorm(x) @ Wi) @ Wo).

    hidden_states: [B, S, D]; ln_weight: [D]; wi: [D, F]; wo: [F, D].
    Dropout is identity (inference).
    """
    B, S, D = hidden_states.shape
    Dw, F = wi.shape
    assert Dw == D and wo.shape == (F, D) and ln_weight.shape == (D,)

    rows = B * S
    out_dtype = hidden_states.dtype
    x_bytes = jnp.dtype(out_dtype).itemsize
    w_bytes = jnp.dtype(wi.dtype).itemsize
    sub = 8 if x_bytes >= 4 else 16      # sublane multiple for the row tile

    # Lane-dense targets. Standard T5 dims (768/1024/2048/4096...) are already
    # %128 == 0, in which case no pad copy is issued at all.
    Dp = _round_up(D, 128)
    Fp = _round_up(F, 128)

    budget = int(_vmem_budget_bytes() * 0.8)
    tm, tf = _select_tiles(rows, Dp, Fp, x_bytes, w_bytes, sub, budget)

    rows_p = _round_up(rows, tm)
    Fp2 = _round_up(Fp, tf)              # whole number of d_ff tiles
    n_row, n_f = rows_p // tm, Fp2 // tf

    # Zero padding keeps the math exact: padded rows/lanes stay zero through
    # RMS-norm, relu and both (zero-extended) matmuls, and are sliced off.
    # TODO(synk): in a full model, cache the padded weights across calls
    # instead of re-padding per call (a no-op for standard %128 T5 dims).
    x2 = hidden_states.reshape(rows, D)
    if rows_p != rows or Dp != D:
        x2 = jnp.pad(x2, ((0, rows_p - rows), (0, Dp - D)))
    lnw2 = ln_weight.reshape(1, D)
    if Dp != D:
        lnw2 = jnp.pad(lnw2, ((0, 0), (0, Dp - D)))
    wip, wop = wi, wo
    if Dp != D or Fp2 != F:
        wip = jnp.pad(wi, ((0, Dp - D), (0, Fp2 - F)))
        wop = jnp.pad(wo, ((0, Fp2 - F), (0, Dp - D)))

    kernel = functools.partial(_t5_ff_kernel, eps=eps, d_model=D)

    flops = 4 * rows_p * Dp * Fp2
    bytes_accessed = (2 * rows_p * Dp * x_bytes
                      + 2 * Dp * Fp2 * w_bytes * (n_row if n_f > 1 else 1)
                      + Dp * jnp.dtype(ln_weight.dtype).itemsize)

    out2 = pl.pallas_call(
        kernel,
        out_shape=jax.ShapeDtypeStruct((rows_p, Dp), out_dtype),
        grid_spec=pltpu.PrefetchScalarGridSpec(
            num_scalar_prefetch=0,
            grid=(n_row, n_f),
            in_specs=[
                pl.BlockSpec((tm, Dp), lambda i, f: (i, 0)),    # x row tile
                pl.BlockSpec((1, Dp), lambda i, f: (0, 0)),     # LN scale
                pl.BlockSpec((Dp, tf), lambda i, f: (0, f)),    # Wi d_ff slice
                pl.BlockSpec((tf, Dp), lambda i, f: (f, 0)),    # Wo d_ff slice
            ],
            out_specs=pl.BlockSpec((tm, Dp), lambda i, f: (i, 0)),
            scratch_shapes=[
                pltpu.VMEM((tm, Dp), wi.dtype),     # cached RMS-normed h
                pltpu.VMEM((tm, Dp), jnp.float32),  # f32 accumulator
            ],
        ),
        compiler_params=pltpu.CompilerParams(
            dimension_semantics=("parallel", "arbitrary"),
            vmem_limit_bytes=_vmem_budget_bytes(),
        ),
        cost_estimate=pl.CostEstimate(
            flops=flops, transcendentals=rows_p, bytes_accessed=bytes_accessed),
    )(x2, lnw2, wip, wop)

    if rows_p != rows or Dp != D:
        out2 = out2[:rows, :D]
    return out2.reshape(B, S, D)


def _reference(hidden_states, ln_weight, wi, wo, eps=1e-6):
    xf = hidden_states.astype(jnp.float32)
    var = jnp.mean(xf * xf, axis=-1, keepdims=True)
    normed = ln_weight * (xf * lax.rsqrt(var + eps))
    ff = jnp.maximum(normed @ wi, 0.0) @ wo
    return hidden_states + ff


if __name__ == "__main__":
    # Small shapes consistent with the module's forward (batch, seq, d_model).
    batch, seq, d_model, d_ff = 2, 8, 32, 64
    init_std = 0.02
    num_layers = 2

    key = jax.random.PRNGKey(0)
    kx, kwi, kwo = jax.random.split(key, 3)

    hidden_states = jax.random.normal(kx, (batch, seq, d_model), dtype=jnp.float32)
    ln_weight = jnp.ones((d_model,), dtype=jnp.float32)   # T5LayerNorm init: ones
    wi = init_std * jax.random.normal(kwi, (d_model, d_ff), dtype=jnp.float32)
    wo = (init_std / (2.0 * num_layers) ** 0.5) * jax.random.normal(
        kwo, (d_ff, d_model), dtype=jnp.float32)

    out = t5_layer_ff(hidden_states, ln_weight, wi, wo, eps=1e-6)
    out = jax.block_until_ready(out)

    ref = _reference(hidden_states, ln_weight, wi, wo, eps=1e-6)
    assert out.shape == hidden_states.shape and out.dtype == hidden_states.dtype
    assert jnp.allclose(out, ref, atol=1e-5, rtol=1e-5), "mismatch vs reference"

    print("KERNEL_OK")
</pallas_src>

<mosaic_0001>
module attributes {stable_mosaic.version = 11 : i64} {
  func.func @_t5_ff_kernel(%arg0: i32, %arg1: i32, %arg2: memref<8x128xf32, #tpu.memory_space<vmem>>, %arg3: memref<1x128xf32, #tpu.memory_space<vmem>>, %arg4: memref<128x128xf32, #tpu.memory_space<vmem>>, %arg5: memref<128x128xf32, #tpu.memory_space<vmem>>, %arg6: memref<8x128xf32, #tpu.memory_space<vmem>>, %arg7: memref<8x128xf32, #tpu.memory_space<vmem>>, %arg8: memref<8x128xf32, #tpu.memory_space<vmem>>) attributes {dimension_semantics = [#tpu.dimension_semantics<parallel>, #tpu.dimension_semantics<arbitrary>], iteration_bounds = array<i64: 2, 1>, scalar_prefetch = 0 : i64, scratch_operands = 2 : i64, tpu.core_type = #tpu.core_type<tc>, window_params = [{transform_indices = @transform_0, window_bounds = array<i64: 8, 128>}, {pipeline_mode = #tpu.pipeline_mode<synchronous>, transform_indices = @transform_1, window_bounds = array<i64: 1, 128>}, {transform_indices = @transform_2, window_bounds = array<i64: 128, 128>}, {transform_indices = @transform_3, window_bounds = array<i64: 128, 128>}, {transform_indices = @transform_4, window_bounds = array<i64: 8, 128>}]} {
    %c0_i32 = arith.constant 0 : i32
    %0 = arith.cmpi eq, %arg1, %c0_i32 : i32
    %1 = arith.extui %0 : i1 to i32
    %c0_i32_0 = arith.constant 0 : i32
    %2 = arith.cmpi ne, %1, %c0_i32_0 : i32
    scf.if %2 {
      %c0_14 = arith.constant 0 : index
      %c0_15 = arith.constant 0 : index
      %16 = vector.load %arg2[%c0_14, %c0_15] : memref<8x128xf32, #tpu.memory_space<vmem>>, vector<8x128xf32>
      %17 = arith.mulf %16, %16 : vector<8x128xf32>
      %cst_16 = arith.constant dense<0.000000e+00> : vector<8xf32>
      %18 = vector.multi_reduction <add>, %17, %cst_16 [1] : vector<8x128xf32> to vector<8xf32>
      %19 = vector.shape_cast %18 : vector<8xf32> to vector<8x1xf32>
      %cst_17 = arith.constant 3.125000e-02 : f32
      %20 = vector.broadcast %cst_17 : f32 to vector<8x1xf32>
      %21 = arith.mulf %19, %20 : vector<8x1xf32>
      %cst_18 = arith.constant 9.99999997E-7 : f32
      %22 = vector.broadcast %cst_18 : f32 to vector<8x1xf32>
      %23 = arith.addf %21, %22 : vector<8x1xf32>
      %24 = math.rsqrt %23 : vector<8x1xf32>
      %c0_19 = arith.constant 0 : index
      %c0_20 = arith.constant 0 : index
      %25 = vector.load %arg3[%c0_19, %c0_20] : memref<1x128xf32, #tpu.memory_space<vmem>>, vector<1x128xf32>
      %26 = vector.broadcast %24 : vector<8x1xf32> to vector<8x128xf32>
      %27 = arith.mulf %16, %26 : vector<8x128xf32>
      %28 = vector.broadcast %25 : vector<1x128xf32> to vector<8x128xf32>
      %29 = arith.mulf %28, %27 : vector<8x128xf32>
      %c0_21 = arith.constant 0 : index
      %c0_22 = arith.constant 0 : index
      %30 = vector.load %arg7[%c0_21, %c0_22] : memref<8x128xf32, #tpu.memory_space<vmem>>, vector<8x128xf32>
      tpu.vector_store %arg7[%c0_21, %c0_22], %29 {strides = array<i32>} : memref<8x128xf32, #tpu.memory_space<vmem>>, vector<8x128xf32>,
      %cst_23 = arith.constant 0.000000e+00 : f32
      %31 = vector.broadcast %cst_23 : f32 to vector<8x128xf32>
      %c0_24 = arith.constant 0 : index
      %c0_25 = arith.constant 0 : index
      %32 = vector.load %arg8[%c0_24, %c0_25] : memref<8x128xf32, #tpu.memory_space<vmem>>, vector<8x128xf32>
      tpu.vector_store %arg8[%c0_24, %c0_25], %31 {strides = array<i32>} : memref<8x128xf32, #tpu.memory_space<vmem>>, vector<8x128xf32>,
    } else {
    }
    %c0 = arith.constant 0 : index
    %c0_1 = arith.constant 0 : index
    %3 = vector.load %arg7[%c0, %c0_1] : memref<8x128xf32, #tpu.memory_space<vmem>>, vector<8x128xf32>
    %c0_2 = arith.constant 0 : index
    %c0_3 = arith.constant 0 : index
    %4 = vector.load %arg4[%c0_2, %c0_3] : memref<128x128xf32, #tpu.memory_space<vmem>>, vector<128x128xf32>
    %cst = arith.constant dense<0.000000e+00> : vector<8x128xf32>
    %5 = tpu.matmul %3, %4, %cst {dimension_numbers = #tpu.dot_dimension_numbers<[1], [0], [0], [1], [0, 0, 1, 1], [], []>} : vector<8x128xf32>, vector<128x128xf32>, vector<8x128xf32> -> vector<8x128xf32>
    %cst_4 = arith.constant 0.000000e+00 : f32
    %6 = vector.broadcast %cst_4 : f32 to vector<8x128xf32>
    %7 = arith.maximumf %5, %6 : vector<8x128xf32>
    %c0_5 = arith.constant 0 : index
    %c0_6 = arith.constant 0 : index
    %8 = vector.load %arg8[%c0_5, %c0_6] : memref<8x128xf32, #tpu.memory_space<vmem>>, vector<8x128xf32>
    %c0_7 = arith.constant 0 : index
    %c0_8 = arith.constant 0 : index
    %9 = vector.load %arg5[%c0_7, %c0_8] : memref<128x128xf32, #tpu.memory_space<vmem>>, vector<128x128xf32>
    %cst_9 = arith.constant dense<0.000000e+00> : vector<8x128xf32>
    %10 = tpu.matmul %7, %9, %cst_9 {dimension_numbers = #tpu.dot_dimension_numbers<[1], [0], [0], [1], [0, 0, 1, 1], [], []>} : vector<8x128xf32>, vector<128x128xf32>, vector<8x128xf32> -> vector<8x128xf32>
    %11 = arith.addf %8, %10 : vector<8x128xf32>
    %c0_10 = arith.constant 0 : index
    %c0_11 = arith.constant 0 : index
    %12 = vector.load %arg8[%c0_10, %c0_11] : memref<8x128xf32, #tpu.memory_space<vmem>>, vector<8x128xf32>
    tpu.vector_store %arg8[%c0_10, %c0_11], %11 {strides = array<i32>} : memref<8x128xf32, #tpu.memory_space<vmem>>, vector<8x128xf32>,
    %c0_i32_12 = arith.constant 0 : i32
    %13 = arith.cmpi eq, %arg1, %c0_i32_12 : i32
    %14 = arith.extui %13 : i1 to i32
    %c0_i32_13 = arith.constant 0 : i32
    %15 = arith.cmpi ne, %14, %c0_i32_13 : i32
    scf.if %15 {
      %c0_14 = arith.constant 0 : index
      %c0_15 = arith.constant 0 : index
      %16 = vector.load %arg2[%c0_14, %c0_15] : memref<8x128xf32, #tpu.memory_space<vmem>>, vector<8x128xf32>
      %c0_16 = arith.constant 0 : index
      %c0_17 = arith.constant 0 : index
      %17 = vector.load %arg8[%c0_16, %c0_17] : memref<8x128xf32, #tpu.memory_space<vmem>>, vector<8x128xf32>
      %18 = arith.addf %16, %17 : vector<8x128xf32>
      %c0_18 = arith.constant 0 : index
      %c0_19 = arith.constant 0 : index
      %19 = vector.load %arg6[%c0_18, %c0_19] : memref<8x128xf32, #tpu.memory_space<vmem>>, vector<8x128xf32>
      tpu.vector_store %arg6[%c0_18, %c0_19], %18 {strides = array<i32>} : memref<8x128xf32, #tpu.memory_space<vmem>>, vector<8x128xf32>,
    } else {
    }
    return
  }
  func.func @transform_0(%arg0: i32, %arg1: i32) -> (i32, i32) {
    %c0_i32 = arith.constant 0 : i32
    %c0_i32_0 = arith.constant 0 : i32
    return %arg0, %c0_i32 : i32, i32
  }
  func.func @transform_1(%arg0: i32, %arg1: i32) -> (i32, i32) {
    %c0_i32 = arith.constant 0 : i32
    %c0_i32_0 = arith.constant 0 : i32
    %c0_i32_1 = arith.constant 0 : i32
    return %c0_i32, %c0_i32_0 : i32, i32
  }
  func.func @transform_2(%arg0: i32, %arg1: i32) -> (i32, i32) {
    %c0_i32 = arith.constant 0 : i32
    %c0_i32_0 = arith.constant 0 : i32
    return %c0_i32, %arg1 : i32, i32
  }
  func.func @transform_3(%arg0: i32, %arg1: i32) -> (i32, i32) {
    %c0_i32 = arith.constant 0 : i32
    %c0_i32_0 = arith.constant 0 : i32
    return %arg1, %c0_i32 : i32, i32
  }
  func.func @transform_4(%arg0: i32, %arg1: i32) -> (i32, i32) {
    %c0_i32 = arith.constant 0 : i32
    %c0_i32_0 = arith.constant 0 : i32
    return %arg0, %c0_i32 : i32, i32
  }
}

</mosaic_0001>

<llo_original>
// kernel: tpu_custom_call.1
$region0: #{tpu_custom_call.1}
  #allocation0 [shape = 'u32[]', space=smem, size = 0x4, offset = 0x4, fixed_abs, tag = 'smem constant byte address 0x4 - core index']
  #allocation1 [shape = 'u32[144,128]{1,0:T(1,128)}', space=vmem, size = 0x12000, scoped, tag = 'internal scratch']
  #allocation2 [shape = 'f32[8,128]{1,0:T(8,128)}', space=vmem, size = 0x1000, scoped, tag = 'scratch operand']
  #allocation3 [shape = 'f32[8,128]{1,0:T(8,128)}', space=vmem, size = 0x1000, scoped, tag = 'scratch operand']
  %s0 = inlined_call_operand.hbm [shape: f32[16,128], index: 0, kind: input, shape index: {}]
  %s1 = inlined_call_operand.hbm [shape: f32[1,128], index: 1, kind: input, shape index: {}]
  %s2 = inlined_call_operand.hbm [shape: f32[128,128], index: 2, kind: input, shape index: {}]
  %s3 = inlined_call_operand.hbm [shape: f32[128,128], index: 3, kind: input, shape index: {}]
  %s4 = inlined_call_operand.hbm [shape: f32[16,128], index: 4, kind: output, shape index: {}]
  %s5 = sld [smem:[#allocation0]]
  $region73: #{tpu_custom_call.1} parent=0
    _
  %s7 = ssub.s32 1, %s5
  %s8 = scalar_select 0, %s7, %s5
  $region1: #{tpu_custom_call.1} parent=0
    #allocation4 [shape = 'u8[8192]{0}', space=vmem, size = 0x2000, scoped, tag = 'input window, operand 0']
    #allocation5 [shape = 's32[2]{0}', space=sflag, size = 0x8, scoped, tag = 'scoped memory for tpu_custom_call.1']
    #allocation6 [shape = 's32[2]{0}', space=sflag, size = 0x8, scoped, tag = 'scoped memory for tpu_custom_call.1']
    #allocation7 [shape = 'u8[512]{0}', space=vmem, size = 0x400, scoped, tag = 'input window, operand 1, single buffered']
    #allocation8 [shape = 's32[1]{0}', space=sflag, size = 0x4, scoped, tag = 'scoped memory for tpu_custom_call.1']
    #allocation9 [shape = 'u8[65536]{0}', space=vmem, size = 0x10000, scoped, tag = 'input window, operand 2, single buffered']
    #allocation10 [shape = 'u8[65536]{0}', space=vmem, size = 0x10000, scoped, tag = 'input window, operand 3, single buffered']
    #allocation11 [shape = 's32[1]{0}', space=sflag, size = 0x4, scoped, tag = 'scoped memory for tpu_custom_call.1']
    #allocation12 [shape = 'u8[8192]{0}', space=vmem, size = 0x2000, scoped, tag = 'output window, operand 0']
    %9 = vsyncpa [#allocation5], 0
    %s10 = scalar_lea.sflag [#allocation5], 1
    %11 = vsyncpa %s10, 0
    %12 = vsyncpa [#allocation8], 0
    %13 = vsyncpa [#allocation11], 0
    %14 = vsyncpa [#allocation6], 0
    %s15 = scalar_lea.sflag [#allocation6], 1
    %16 = vsyncpa %s15, 0
    loop: start=0, step=1, limit=4
    $region2: #{tpu_custom_call.1} parent=1 // loop_pre_header
      _
    $region3: #{tpu_custom_call.1} parent=1 // loop_header
      %s18 = sphi 0, %s22
      %p19 = scmp.ge.s32.totalorder %s18, 4
      %s25 = sphi 0, %s37
      %s26 = sphi 0, %s33
      %s27 = sphi 0, %s25
      %s28 = sphi 0, %s26
      %s29 = sphi 0, %s27
      %s30 = sphi 0, %s28
      %s40 = sphi 0, %s42
      %s43 = sphi 0, %s40
      %s44 = sphi 0, %s43
      %s60 = sphi 0, %s44
      %s64 = sphi 0, %s64
      %s66 = sphi 0, %s64
      %s67 = sphi 0, %s66
      %s81 = sphi 0, %s67
      %s87 = sphi 0, %s89
      %s90 = sphi 0, %s87
      %s91 = sphi 0, %s90
      %s107 = sphi 0, %s91
      %s113 = sphi 0, %s115
      %s116 = sphi 0, %s113
      %s117 = sphi 0, %s116
      %s133 = sphi 0, %s117
      %s139 = sphi 0, %s141
      %s142 = sphi 0, %s139
      %s143 = sphi 0, %s142
      %s159 = sphi 0, %s143
    $region4: #{tpu_custom_call.1} parent=1 // loop_header_branch
      %21 = sbr.rel (%p19) target = $region8
    $region5: #{tpu_custom_call.1} parent=1 // loop_body
      %s23 = ssub.s32 %s18, 1
      %s24 = ssub.s32 %s18, 2
      %s31 = sadd.s32 1, %s26
      %p32 = scmp.ge.s32.totalorder %s31, 1
      %s33 = scalar_select %p32, 0, %s31
      %s34 = sadd.s32 1, %s25
      %s35 = scalar_select %p32, %s34, %s25
      %p36 = scmp.ge.s32.totalorder %s35, 2
      %s37 = scalar_select %p36, 0, %s35
      %s38 = ssub.s32 %s25, %s37
      %p39 = scmp.eq.s32.totalorder %s38, 0
      %s41 = sadd.s32 %s40, 1
      %s42 = scalar_select %p39, %s40, %s41
      %p45 = pneg %p39
      %p46 = scmp.eq.s32.totalorder %s18, 1
      %p47 = por %p45, %p46
      %p48 = scmp.ne.s32.totalorder %s40, %s43
      %p49 = scmp.eq.s32.totalorder %s18, 0
      %p50 = por %p48, %p49
      %p51 = scmp.ne.s32.totalorder %s40, %s43
      %p52 = scmp.eq.s32.totalorder %s23, 1
      %p53 = por %p51, %p52
      %p54 = scmp.ne.s32.totalorder %s43, %s44
      %p55 = scmp.eq.s32.totalorder %s23, 0
      %p56 = por %p54, %p55
      %p57 = scmp.ne.s32.totalorder %s43, %s44
      %p58 = scmp.eq.s32.totalorder %s24, 1
      %p59 = por %p57, %p58
      %p61 = scmp.ne.s32.totalorder %s44, %s60
      %p62 = scmp.eq.s32.totalorder %s24, 0
      %p63 = por %p61, %p62
      %s65 = sadd.s32 %s64, 1
      %p68 = scmp.eq.s32.totalorder %s18, 1
      %p69 = scmp.ne.s32.totalorder %s64, %s66
      %p70 = scmp.eq.s32.totalorder %s18, 0
      %p71 = por %p69, %p70
      %p72 = scmp.ne.s32.totalorder %s64, %s66
      %p73 = scmp.eq.s32.totalorder %s23, 1
      %p74 = por %p72, %p73
      %p75 = scmp.ne.s32.totalorder %s66, %s67
      %p76 = scmp.eq.s32.totalorder %s23, 0
      %p77 = por %p75, %p76
      %p78 = scmp.ne.s32.totalorder %s66, %s67
      %p79 = scmp.eq.s32.totalorder %s24, 1
      %p80 = por %p78, %p79
      %p82 = scmp.ne.s32.totalorder %s67, %s81
      %p83 = scmp.eq.s32.totalorder %s24, 0
      %p84 = por %p82, %p83
      %s85 = ssub.s32 %s26, %s33
      %p86 = scmp.eq.s32.totalorder %s85, 0
      %s88 = sadd.s32 %s87, 1
      %s89 = scalar_select %p86, %s87, %s88
      %p92 = pneg %p86
      %p93 = scmp.eq.s32.totalorder %s18, 1
      %p94 = por %p92, %p93
      %p95 = scmp.ne.s32.totalorder %s87, %s90
      %p96 = scmp.eq.s32.totalorder %s18, 0
      %p97 = por %p95, %p96
      %p98 = scmp.ne.s32.totalorder %s87, %s90
      %p99 = scmp.eq.s32.totalorder %s23, 1
      %p100 = por %p98, %p99
      %p101 = scmp.ne.s32.totalorder %s90, %s91
      %p102 = scmp.eq.s32.totalorder %s23, 0
      %p103 = por %p101, %p102
      %p104 = scmp.ne.s32.totalorder %s90, %s91
      %p105 = scmp.eq.s32.totalorder %s24, 1
      %p106 = por %p104, %p105
      %p108 = scmp.ne.s32.totalorder %s91, %s107
      %p109 = scmp.eq.s32.totalorder %s24, 0
      %p110 = por %p108, %p109
      %s111 = ssub.s32 %s26, %s33
      %p112 = scmp.eq.s32.totalorder %s111, 0
      %s114 = sadd.s32 %s113, 1
      %s115 = scalar_select %p112, %s113, %s114
      %p118 = pneg %p112
      %p119 = scmp.eq.s32.totalorder %s18, 1
      %p120 = por %p118, %p119
      %p121 = scmp.ne.s32.totalorder %s113, %s116
      %p122 = scmp.eq.s32.totalorder %s18, 0
      %p123 = por %p121, %p122
      %p124 = scmp.ne.s32.totalorder %s113, %s116
      %p125 = scmp.eq.s32.totalorder %s23, 1
      %p126 = por %p124, %p125
      %p127 = scmp.ne.s32.totalorder %s116, %s117
      %p128 = scmp.eq.s32.totalorder %s23, 0
      %p129 = por %p127, %p128
      %p130 = scmp.ne.s32.totalorder %s116, %s117
      %p131 = scmp.eq.s32.totalorder %s24, 1
      %p132 = por %p130, %p131
      %p134 = scmp.ne.s32.totalorder %s117, %s133
      %p135 = scmp.eq.s32.totalorder %s24, 0
      %p136 = por %p134, %p135
      %s137 = ssub.s32 %s25, %s37
      %p138 = scmp.eq.s32.totalorder %s137, 0
      %s140 = sadd.s32 %s139, 1
      %s141 = scalar_select %p138, %s139, %s140
      %p144 = pneg %p138
      %p145 = scmp.eq.s32.totalorder %s18, 1
      %p146 = por %p144, %p145
      %p147 = scmp.ne.s32.totalorder %s139, %s142
      %p148 = scmp.eq.s32.totalorder %s18, 0
      %p149 = por %p147, %p148
      %p150 = scmp.ne.s32.totalorder %s139, %s142
      %p151 = scmp.eq.s32.totalorder %s23, 1
      %p152 = por %p150, %p151
      %p153 = scmp.ne.s32.totalorder %s142, %s143
      %p154 = scmp.eq.s32.totalorder %s23, 0
      %p155 = por %p153, %p154
      %p156 = scmp.ne.s32.totalorder %s142, %s143
      %p157 = scmp.eq.s32.totalorder %s24, 1
      %p158 = por %p156, %p157
      %p160 = scmp.ne.s32.totalorder %s143, %s159
      %p161 = scmp.eq.s32.totalorder %s24, 0
      %p162 = por %p160, %p161
      %p163 = scmp.le.s32.totalorder 1, %s18
      %p164 = scmp.lt.s32.totalorder %s18, 3
      %p165 = pnand %p163, %p164
      %p166 = pneg %p165
      // Predicated region
      $region9: #{tpu_custom_call.1} parent=5 // pred_check
        _
      $region10: #{tpu_custom_call.1} parent=5 // pred_check_branch
        %168 = sbr.rel (%p165) target = $region12
      $region11: #{tpu_custom_call.1} parent=5 // pred_region
        %s169 = ssub.s32 %s18, 1
        // Predicated region
        $region13: #{tpu_custom_call.1} parent=11 // pred_check
          %p170 = pneg %p77
        $region14: #{tpu_custom_call.1} parent=11 // pred_check_branch
          %172 = sbr.rel (%p170) target = $region16
        $region15: #{tpu_custom_call.1} parent=11 // pred_region
          %s174 = ssub.s32 16, 16
          %175 = vsyncadd [#allocation8], %s174
          %s177 = sshll.u32 [#allocation7], 4
          %s178 = int_to_ptr.vmem [resolvable:$true] %s177
          %180 = dma.hbm_to_vmem [thread:$0]  %s1, 16, %s178, [#allocation8]
        $region16: #{tpu_custom_call.1} parent=11 // pred_fallthru
          _
        // Predicated region
        $region17: #{tpu_custom_call.1} parent=11 // pred_check
          %p181 = pneg %p103
        $region18: #{tpu_custom_call.1} parent=11 // pred_check_branch
          %183 = sbr.rel (%p181) target = $region20
        $region19: #{tpu_custom_call.1} parent=11 // pred_region
          %s185 = ssub.s32 2048, 2048
          %186 = vsyncadd [#allocation8], %s185
          %s187 = smul.addr %s28, 128
          %s188 = scalar_lea.hbm %s2, %s187
          %s189 = sshll.u32 [#allocation9], 4
          %s190 = int_to_ptr.vmem [resolvable:$true] %s189
          %195 = dma.hbm_to_vmem [thread:$0]  %s188, 2048, %s190, [#allocation8], 128, 128, 8
        $region20: #{tpu_custom_call.1} parent=11 // pred_fallthru
          _
        // Predicated region
        $region21: #{tpu_custom_call.1} parent=11 // pred_check
          %p196 = pneg %p129
        $region22: #{tpu_custom_call.1} parent=11 // pred_check_branch
          %198 = sbr.rel (%p196) target = $region24
        $region23: #{tpu_custom_call.1} parent=11 // pred_region
          %s199 = smul.u32 16, %s28
          %s201 = ssub.s32 2048, 2048
          %202 = vsyncadd [#allocation11], %s201
          %s203 = smul.addr %s199, 128
          %s204 = scalar_lea.hbm %s3, %s203
          %s205 = sshll.u32 [#allocation10], 4
          %s206 = int_to_ptr.vmem [resolvable:$true] %s205
          %211 = dma.hbm_to_vmem [thread:$0]  %s204, 2048, %s206, [#allocation11], 128, 128, 8
        $region24: #{tpu_custom_call.1} parent=11 // pred_fallthru
          _
      $region12: #{tpu_custom_call.1} parent=5 // pred_fallthru
        _
      %p212 = scmp.lt.s32.totalorder %s18, 2
      // Predicated region
      $region25: #{tpu_custom_call.1} parent=5 // pred_check
        %p213 = pneg %p212
      $region26: #{tpu_custom_call.1} parent=5 // pred_check_branch
        %215 = sbr.rel (%p213) target = $region28
      $region27: #{tpu_custom_call.1} parent=5 // pred_region
        // Predicated region
        $region29: #{tpu_custom_call.1} parent=27 // pred_check
          %p216 = pneg %p50
        $region30: #{tpu_custom_call.1} parent=27 // pred_check_branch
          %218 = sbr.rel (%p216) target = $region32
        $region31: #{tpu_custom_call.1} parent=27 // pred_region
          %s219 = sand.u32 %s40, 1
          %s220 = scalar_lea.sflag [#allocation5], %s219
          %s221 = sand.u32 %s40, 1
          %s222 = smul.addr %s221, 8
          %s223 = scalar_lea.vmem [#allocation4], %s222
          %s225 = ssub.s32 128, 128
          %226 = vsyncadd %s220, %s225
          %s227 = smul.addr %s25, 128
          %s228 = scalar_lea.hbm %s0, %s227
          %s230 = sshll.u32 %s223, 4
          %s231 = int_to_ptr.vmem [resolvable:$true] %s230
          %233 = dma.hbm_to_vmem [thread:$0]  %s228, 128, %s231, %s220
        $region32: #{tpu_custom_call.1} parent=27 // pred_fallthru
          _
      $region28: #{tpu_custom_call.1} parent=5 // pred_fallthru
        _
      %p234 = scmp.le.s32.totalorder 1, %s18
      %p235 = scmp.lt.s32.totalorder %s18, 3
      %p236 = pnand %p234, %p235
      %p237 = pneg %p236
      // Predicated region
      $region33: #{tpu_custom_call.1} parent=5 // pred_check
        _
      $region34: #{tpu_custom_call.1} parent=5 // pred_check_branch
        %239 = sbr.rel (%p236) target = $region36
      $region35: #{tpu_custom_call.1} parent=5 // pred_region
        %s240 = ssub.s32 %s18, 1
        %s241 = sand.u32 %s43, 1
        %s242 = scalar_lea.sflag [#allocation5], %s241
        %s243 = sand.u32 %s43, 1
        %s244 = smul.addr %s243, 8
        %s245 = scalar_lea.vmem [#allocation4], %s244
        // Predicated region
        $region37: #{tpu_custom_call.1} parent=35 // pred_check
          %p246 = pneg %p56
        $region38: #{tpu_custom_call.1} parent=35 // pred_check_branch
          %248 = sbr.rel (%p246) target = $region40
        $region39: #{tpu_custom_call.1} parent=35 // pred_region
          %249 = dma.done %s242, 128
        $region40: #{tpu_custom_call.1} parent=35 // pred_fallthru
          _
        // Predicated region
        $region41: #{tpu_custom_call.1} parent=35 // pred_check
          %p250 = pneg %p77
        $region42: #{tpu_custom_call.1} parent=35 // pred_check_branch
          %252 = sbr.rel (%p250) target = $region44
        $region43: #{tpu_custom_call.1} parent=35 // pred_region
          %253 = dma.done [#allocation8], 16
        $region44: #{tpu_custom_call.1} parent=35 // pred_fallthru
          _
        // Predicated region
        $region45: #{tpu_custom_call.1} parent=35 // pred_check
          %p254 = pneg %p103
        $region46: #{tpu_custom_call.1} parent=35 // pred_check_branch
          %256 = sbr.rel (%p254) target = $region48
        $region47: #{tpu_custom_call.1} parent=35 // pred_region
          %257 = dma.done [#allocation8], 2048
        $region48: #{tpu_custom_call.1} parent=35 // pred_fallthru
          _
        // Predicated region
        $region49: #{tpu_custom_call.1} parent=35 // pred_check
          %p258 = pneg %p129
        $region50: #{tpu_custom_call.1} parent=35 // pred_check_branch
          %260 = sbr.rel (%p258) target = $region52
        $region51: #{tpu_custom_call.1} parent=35 // pred_region
          %261 = dma.done [#allocation11], 2048
        $region52: #{tpu_custom_call.1} parent=35 // pred_fallthru
          _
        %s262 = sand.u32 %s43, 1
        %s263 = scalar_lea.sflag [#allocation5], %s262
        %s264 = sand.u32 %s43, 1
        %s265 = smul.addr %s264, 8
        %s266 = scalar_lea.vmem [#allocation4], %s265
        %p267 = pneg %p56
        %p268 = pneg %p53
        %p269 = pneg %p77
        %p270 = pneg %p74
        %p271 = pneg %p103
        %p272 = pneg %p100
        %p273 = pneg %p129
        %p274 = pneg %p126
        %p275 = pneg %p155
        %p276 = pneg %p152
        %s277 = sand.u32 %s142, 1
        %s278 = scalar_lea.sflag [#allocation6], %s277
        %s279 = sand.u32 %s142, 1
        %s280 = smul.addr %s279, 8
        %s281 = scalar_lea.vmem [#allocation12], %s280
        %s282 = smul.u32 16, %s28
        %p283 = scmp.eq.s32.totalorder %s28, 0
        // Predicated region
        $region53: #{tpu_custom_call.1} parent=35 // pred_check
          %p284 = pneg %p283
        $region54: #{tpu_custom_call.1} parent=35 // pred_check_branch
          %286 = sbr.rel (%p284) target = $region56
        $region55: #{tpu_custom_call.1} parent=35 // pred_region
          %v287 = vld [vmem:[%s245] sm:$0xff]
          %v288 = vmul.f32 %v287, %v287
          %289 = vadd.xlane.f32.xlu0 %v288
          %v290 = vpop.xlane.xlu0 %289
          %v291 = vmul.f32 %v290, 0.03125
          %v292 = vadd.f32 %v291, 1e-06
          %v293 = vrsqrt.pop %v292
          %v294 = vld [vmem:[#allocation7] sm:$0x1]
          %v295 = vmul.f32 %v287, %v293
          %v297 = vlaneseq
          %v298 = vshrl.u32 %v297, 7
          %v299 = vsub.s32 0, %v298
          %v300 = vrot.slane %v294, %v299
          %v302 = vmul.f32 %v300, %v295
          %303 = vst [vmem:[#allocation2] sm:$0xff] %v302
          %304 = vst [vmem:[#allocation3] sm:$0xff] 0.0
        $region56: #{tpu_custom_call.1} parent=35 // pred_fallthru
          _
        %v305 = vld [vmem:[#allocation2] sm:$0xff]
        %v306 = vld [vmem:[#allocation9] sm:$0xff]
        %v307 = vld [vmem:[#allocation9 + $0x8] sm:$0xff]
        %v308 = vld [vmem:[#allocation9 + $0x10] sm:$0xff]
        %v309 = vld [vmem:[#allocation9 + $0x18] sm:$0xff]
        %v310 = vld [vmem:[#allocation9 + $0x20] sm:$0xff]
        %v311 = vld [vmem:[#allocation9 + $0x28] sm:$0xff]
        %v312 = vld [vmem:[#allocation9 + $0x30] sm:$0xff]
        %v313 = vld [vmem:[#allocation9 + $0x38] sm:$0xff]
        %v314 = vld [vmem:[#allocation9 + $0x40] sm:$0xff]
        %v315 = vld [vmem:[#allocation9 + $0x48] sm:$0xff]
        %v316 = vld [vmem:[#allocation9 + $0x50] sm:$0xff]
        %v317 = vld [vmem:[#allocation9 + $0x58] sm:$0xff]
        %v318 = vld [vmem:[#allocation9 + $0x60] sm:$0xff]
        %v319 = vld [vmem:[#allocation9 + $0x68] sm:$0xff]
        %v320 = vld [vmem:[#allocation9 + $0x70] sm:$0xff]
        %v321 = vld [vmem:[#allocation9 + $0x78] sm:$0xff]
        %322 = vmatprep.subr.mxu0 0.0
        %323 = vmatpush1.msra.mxu0 %v306
        %324 = vmatprep.subr.mxu0 0.0
        %325 = vmatpush1.msra.mxu0 %v307
        %326 = vmatprep.subr.mxu0 0.0
        %327 = vmatpush1.msra.mxu0 %v308
        %328 = vmatprep.subr.mxu0 0.0
        %329 = vmatpush1.msra.mxu0 %v309
        %330 = vmatprep.subr.mxu0 0.0
        %331 = vmatpush1.msra.mxu0 %v310
        %332 = vmatprep.subr.mxu0 0.0
        %333 = vmatpush1.msra.mxu0 %v311
        %334 = vmatprep.subr.mxu0 0.0
        %335 = vmatpush1.msra.mxu0 %v312
        %336 = vmatprep.subr.mxu0 0.0
        %337 = vmatpush1.msra.mxu0 %v313
        %338 = vmatprep.subr.mxu0 0.0
        %339 = vmatpush1.msra.mxu0 %v314
        %340 = vmatprep.subr.mxu0 0.0
        %341 = vmatpush1.msra.mxu0 %v315
        %342 = vmatprep.subr.mxu0 0.0
        %343 = vmatpush1.msra.mxu0 %v316
        %344 = vmatprep.subr.mxu0 0.0
        %345 = vmatpush1.msra.mxu0 %v317
        %346 = vmatprep.subr.mxu0 0.0
        %347 = vmatpush1.msra.mxu0 %v318
        %348 = vmatprep.subr.mxu0 0.0
        %349 = vmatpush1.msra.mxu0 %v319
        %350 = vmatprep.subr.mxu0 0.0
        %351 = vmatpush1.msra.mxu0 %v320
        %352 = vmatprep.subr.mxu0 0.0
        %353 = vmatpush1.msra.mxu0 %v321
        %354 = vmatprep.subr.mxu0 0.0
        %355 = vmatpush1.msra.mxu0 0.0
        %356 = vmatprep.subr.mxu0 0.0
        %357 = vmatpush1.msra.mxu0 0.0
        %358 = vmatprep.subr.mxu0 0.0
        %359 = vmatpush1.msra.mxu0 0.0
        %360 = vmatprep.subr.mxu0 0.0
        %361 = vmatpush1.msra.mxu0 0.0
        %362 = vmatprep.subr.mxu0 0.0
        %363 = vmatpush1.msra.mxu0 0.0
        %364 = vmatprep.subr.mxu0 0.0
        %365 = vmatpush1.msra.mxu0 0.0
        %366 = vmatprep.subr.mxu0 0.0
        %367 = vmatpush1.msra.mxu0 0.0
        %368 = vmatprep.subr.mxu0 0.0
        %369 = vmatpush1.msra.mxu0 0.0
        %370 = vmatprep.subr.mxu0 0.0
        %371 = vmatpush1.msra.mxu0 0.0
        %372 = vmatprep.subr.mxu0 0.0
        %373 = vmatpush1.msra.mxu0 0.0
        %374 = vmatprep.subr.mxu0 0.0
        %375 = vmatpush1.msra.mxu0 0.0
        %376 = vmatprep.subr.mxu0 0.0
        %377 = vmatpush1.msra.mxu0 0.0
        %378 = vmatprep.subr.mxu0 0.0
        %379 = vmatpush1.msra.mxu0 0.0
        %380 = vmatprep.subr.mxu0 0.0
        %381 = vmatpush1.msra.mxu0 0.0
        %382 = vmatprep.subr.mxu0 0.0
        %383 = vmatpush1.msra.mxu0 0.0
        %384 = vmatprep.subr.mxu0 0.0
        %385 = vmatpush1.msra.mxu0 0.0
        %386 = vmatprep.mubr.f32.mxu0 0.0
        %387 = vmatmul.mubr.f32.gmra.mrb[0].mxu0 %v305
        %v388 = vpop.f32.mrb[0].mxu0
        %v389 = vadd.f32 0.0, %v388
        %v390 = vpop.f32.mrb[0].mxu0
        %391 = vdwg.mxu0
        %v392 = vmax.f32 %v389, 0.0
        %v393 = vld [vmem:[#allocation3] sm:$0xff]
        %v394 = vld [vmem:[#allocation10] sm:$0xff]
        %v395 = vld [vmem:[#allocation10 + $0x8] sm:$0xff]
        %v396 = vld [vmem:[#allocation10 + $0x10] sm:$0xff]
        %v397 = vld [vmem:[#allocation10 + $0x18] sm:$0xff]
        %v398 = vld [vmem:[#allocation10 + $0x20] sm:$0xff]
        %v399 = vld [vmem:[#allocation10 + $0x28] sm:$0xff]
        %v400 = vld [vmem:[#allocation10 + $0x30] sm:$0xff]
        %v401 = vld [vmem:[#allocation10 + $0x38] sm:$0xff]
        %v402 = vld [vmem:[#allocation10 + $0x40] sm:$0xff]
        %v403 = vld [vmem:[#allocation10 + $0x48] sm:$0xff]
        %v404 = vld [vmem:[#allocation10 + $0x50] sm:$0xff]
        %v405 = vld [vmem:[#allocation10 + $0x58] sm:$0xff]
        %v406 = vld [vmem:[#allocation10 + $0x60] sm:$0xff]
        %v407 = vld [vmem:[#allocation10 + $0x68] sm:$0xff]
        %v408 = vld [vmem:[#allocation10 + $0x70] sm:$0xff]
        %v409 = vld [vmem:[#allocation10 + $0x78] sm:$0xff]
        %410 = vmatprep.subr.mxu0 0.0
        %411 = vmatpush1.msra.mxu0 %v394
        %412 = vmatprep.subr.mxu0 0.0
        %413 = vmatpush1.msra.mxu0 %v395
        %414 = vmatprep.subr.mxu0 0.0
        %415 = vmatpush1.msra.mxu0 %v396
        %416 = vmatprep.subr.mxu0 0.0
        %417 = vmatpush1.msra.mxu0 %v397
        %418 = vmatprep.subr.mxu0 0.0
        %419 = vmatpush1.msra.mxu0 %v398
        %420 = vmatprep.subr.mxu0 0.0
        %421 = vmatpush1.msra.mxu0 %v399
        %422 = vmatprep.subr.mxu0 0.0
        %423 = vmatpush1.msra.mxu0 %v400
        %424 = vmatprep.subr.mxu0 0.0
        %425 = vmatpush1.msra.mxu0 %v401
        %426 = vmatprep.subr.mxu0 0.0
        %427 = vmatpush1.msra.mxu0 %v402
        %428 = vmatprep.subr.mxu0 0.0
        %429 = vmatpush1.msra.mxu0 %v403
        %430 = vmatprep.subr.mxu0 0.0
        %431 = vmatpush1.msra.mxu0 %v404
        %432 = vmatprep.subr.mxu0 0.0
        %433 = vmatpush1.msra.mxu0 %v405
        %434 = vmatprep.subr.mxu0 0.0
        %435 = vmatpush1.msra.mxu0 %v406
        %436 = vmatprep.subr.mxu0 0.0
        %437 = vmatpush1.msra.mxu0 %v407
        %438 = vmatprep.subr.mxu0 0.0
        %439 = vmatpush1.msra.mxu0 %v408
        %440 = vmatprep.subr.mxu0 0.0
        %441 = vmatpush1.msra.mxu0 %v409
        %442 = vmatprep.subr.mxu0 0.0
        %443 = vmatpush1.msra.mxu0 0.0
        %444 = vmatprep.subr.mxu0 0.0
        %445 = vmatpush1.msra.mxu0 0.0
        %446 = vmatprep.subr.mxu0 0.0
        %447 = vmatpush1.msra.mxu0 0.0
        %448 = vmatprep.subr.mxu0 0.0
        %449 = vmatpush1.msra.mxu0 0.0
        %450 = vmatprep.subr.mxu0 0.0
        %451 = vmatpush1.msra.mxu0 0.0
        %452 = vmatprep.subr.mxu0 0.0
        %453 = vmatpush1.msra.mxu0 0.0
        %454 = vmatprep.subr.mxu0 0.0
        %455 = vmatpush1.msra.mxu0 0.0
        %456 = vmatprep.subr.mxu0 0.0
        %457 = vmatpush1.msra.mxu0 0.0
        %458 = vmatprep.subr.mxu0 0.0
        %459 = vmatpush1.msra.mxu0 0.0
        %460 = vmatprep.subr.mxu0 0.0
        %461 = vmatpush1.msra.mxu0 0.0
        %462 = vmatprep.subr.mxu0 0.0
        %463 = vmatpush1.msra.mxu0 0.0
        %464 = vmatprep.subr.mxu0 0.0
        %465 = vmatpush1.msra.mxu0 0.0
        %466 = vmatprep.subr.mxu0 0.0
        %467 = vmatpush1.msra.mxu0 0.0
        %468 = vmatprep.subr.mxu0 0.0
        %469 = vmatpush1.msra.mxu0 0.0
        %470 = vmatprep.subr.mxu0 0.0
        %471 = vmatpush1.msra.mxu0 0.0
        %472 = vmatprep.subr.mxu0 0.0
        %473 = vmatpush1.msra.mxu0 0.0
        %474 = vmatprep.mubr.f32.mxu0 0.0
        %475 = vmatmul.mubr.f32.gmra.mrb[0].mxu0 %v392
        %v476 = vpop.f32.mrb[0].mxu0
        %v477 = vadd.f32 0.0, %v476
        %v478 = vpop.f32.mrb[0].mxu0
        %479 = vdwg.mxu0
        %v480 = vadd.f32 %v393, %v477
        %481 = vst [vmem:[#allocation3] sm:$0xff] %v480
        // Predicated region
        $region57: #{tpu_custom_call.1} parent=35 // pred_check
          %p482 = pneg %p283
        $region58: #{tpu_custom_call.1} parent=35 // pred_check_branch
          %484 = sbr.rel (%p482) target = $region60
        $region59: #{tpu_custom_call.1} parent=35 // pred_region
          %v485 = vld [vmem:[%s245] sm:$0xff]
          %v486 = vld [vmem:[#allocation3] sm:$0xff]
          %v487 = vadd.f32 %v485, %v486
          %488 = vst [vmem:[%s281] sm:$0xff] %v487
        $region60: #{tpu_custom_call.1} parent=35 // pred_fallthru
          _
        %s489 = sand.u32 %s142, 1
        %s490 = scalar_lea.sflag [#allocation6], %s489
        %s491 = sand.u32 %s142, 1
        %s492 = smul.addr %s491, 8
        %s493 = scalar_lea.vmem [#allocation12], %s492
        // Predicated region
        $region61: #{tpu_custom_call.1} parent=35 // pred_check
          %p494 = pneg %p152
        $region62: #{tpu_custom_call.1} parent=35 // pred_check_branch
          %496 = sbr.rel (%p494) target = $region64
        $region63: #{tpu_custom_call.1} parent=35 // pred_region
          %s498 = ssub.s32 128, 128
          %499 = vsyncadd %s490, %s498
          %s500 = smul.addr %s27, 128
          %s501 = scalar_lea.hbm %s4, %s500
          %s503 = sshll.u32 %s493, 4
          %s504 = int_to_ptr.vmem [resolvable:$true] %s503
          %506 = dma.vmem_to_hbm [thread:$0]  %s504, 128, %s501, %s490
        $region64: #{tpu_custom_call.1} parent=35 // pred_fallthru
          _
      $region36: #{tpu_custom_call.1} parent=5 // pred_fallthru
        _
      %p507 = scmp.le.s32.totalorder 2, %s18
      // Predicated region
      $region65: #{tpu_custom_call.1} parent=5 // pred_check
        %p508 = pneg %p507
      $region66: #{tpu_custom_call.1} parent=5 // pred_check_branch
        %510 = sbr.rel (%p508) target = $region68
      $region67: #{tpu_custom_call.1} parent=5 // pred_region
        %s511 = ssub.s32 %s18, 2
        // Predicated region
        $region69: #{tpu_custom_call.1} parent=67 // pred_check
          %p512 = pneg %p158
        $region70: #{tpu_custom_call.1} parent=67 // pred_check_branch
          %514 = sbr.rel (%p512) target = $region72
        $region71: #{tpu_custom_call.1} parent=67 // pred_region
          %s515 = sand.u32 %s143, 1
          %s516 = scalar_lea.sflag [#allocation6], %s515
          %s517 = sand.u32 %s143, 1
          %s518 = smul.addr %s517, 8
          %s519 = scalar_lea.vmem [#allocation12], %s518
          %520 = dma.done %s516, 128
        $region72: #{tpu_custom_call.1} parent=67 // pred_fallthru
          _
      $region68: #{tpu_custom_call.1} parent=5 // pred_fallthru
        _
    $region6: #{tpu_custom_call.1} parent=1 // loop_footer
      %s22 = sadd.s32 1, %s18
    $region7: #{tpu_custom_call.1} parent=1 // loop_footer_branch
      %17 = sbr.rel target = $region3
    $region8: #{tpu_custom_call.1} parent=1 // loop_exit
      _
    %521 = vsyncpa [#allocation5], 1
    %s522 = scalar_lea.sflag [#allocation5], 1
    %523 = vsyncpa %s522, 1
    %524 = vsyncpa [#allocation8], 1
    %525 = vsyncpa [#allocation11], 1
    %526 = vsyncpa [#allocation6], 1
    %s527 = scalar_lea.sflag [#allocation6], 1
    %528 = vsyncpa %s527, 1

</llo_original>
